<compile_context>
chip_gen: v5e
topology: v5e:2x2
jax: 0.10.0
libtpu: 0.0.40
codegen_flags: <defaults>
</compile_context>

<pallas_src>
import jax
import jax.numpy as jnp
from jax import lax
from jax.experimental import pallas as pl
from jax.experimental.pallas import tpu as pltpu

M_EPS = 1e-5
WEIGHTS = (0.7, 0.3)

# Y+D tile pair byte target: 6 MiB -> 12 MiB resident after double-buffering
# (fits v5e's 16 MiB default scoped VMEM; far under v6e/v7x limits).
_TARGET_PAIR_BYTES = 6 << 20


def _divs(n: int, step: int):
    """Divisors of n that are multiples of `step`, ascending."""
    return [d for d in range(step, n + 1, step) if n % d == 0]


def _pick_tiles(rows_p: int, lanes_p: int, bpe: int):
    """Pick (tr, tl) jointly against the byte target.

    rows_p is either a multiple of 8 or <= 8 (full-extent row block);
    lanes_p is always a multiple of 128.
    """
    target = _TARGET_PAIR_BYTES
    total_bytes = rows_p * lanes_p * bpe
    tr_min = 8 if rows_p % 8 == 0 else rows_p   # rows_p % 8 != 0 only when rows_p <= 8

    # Lane tile: largest 128-multiple divisor that keeps even the minimal-row
    # tile pair within budget (lane-dense, contiguous DMA).
    tl = 128
    for d in _divs(lanes_p, 128):
        if d * tr_min * bpe <= target:
            tl = max(tl, d)

    # Row tile: grow to fill the byte budget (keeps tiles large when H*W is
    # small, instead of leaving per-step overhead on the table).
    if rows_p % 8 == 0:
        tr = 8
        for d in _divs(rows_p, 8):
            if d * tl * bpe <= target:
                tr = max(tr, d)
    else:
        tr = rows_p

    # v7x megacore: when there is real work, guarantee >= 2 blocks along a
    # "parallel" axis so both TensorCores get a share of the grid.
    if total_bytes >= (2 << 20) and rows_p == tr and lanes_p == tl:
        if rows_p % 8 == 0 and rows_p >= 16:
            halves = [d for d in _divs(rows_p, 8) if d <= rows_p // 2]
            if halves:
                tr = max(halves)
        if rows_p == tr and lanes_p >= 256:
            halves = [d for d in _divs(lanes_p, 128) if d <= lanes_p // 2]
            if halves:
                tl = max(halves)

    return tr, tl


def _make_loss_kernel(tr: int, tl: int, true_rows: int, true_lanes: int,
                      mask_rows: bool, mask_lanes: bool, binary_mask: bool):
    w0, w1 = WEIGHTS

    def kernel(y_ref, d_ref, out_ref):
        y = y_ref[...].astype(jnp.float32)            # (tr, tl)
        d_raw = d_ref[...]

        if binary_mask:
            # Exact for 0/1 masks: one log per element instead of two
            # (EUP is the binding slot once inputs are narrow).
            mask = d_raw != 0
            term = jnp.log(jnp.where(mask, y, 1.0 - y) + M_EPS)
        else:
            d = d_raw.astype(jnp.float32)
            term = d * jnp.log(y + M_EPS) + (1.0 - d) * jnp.log(1.0 - y + M_EPS)

        # Zero out padded tail rows / lanes (cheap VPU work, only emitted when
        # the wrapper actually padded).
        if mask_lanes:
            col = pl.program_id(1) * tl + lax.broadcasted_iota(jnp.int32, (1, tl), 1)
            term = jnp.where(col < true_lanes, term, 0.0)
        if mask_rows:
            row = pl.program_id(0) * tr + lax.broadcasted_iota(jnp.int32, (tr, 1), 0)
            term = jnp.where(row < true_rows, term, 0.0)

        # Row r of the flattened (B*2, H*W) slab belongs to channel r % 2.
        # tr is even (multiple of 8, or the full even row count), so local
        # parity == global parity; fold the per-channel weights here so each
        # block emits a single weighted partial sum.
        row_ids = lax.broadcasted_iota(jnp.int32, (tr, 1), 0)
        w_rows = jnp.where(row_ids % 2 == 0, jnp.float32(w0), jnp.float32(w1))

        row_sums = jnp.sum(term, axis=1, keepdims=True)           # (tr, 1)
        blk = jnp.sum(row_sums * w_rows, axis=0, keepdims=True)   # (1, 1)

        # Lane-dense (8,128) partial-sum block; wrapper reads [..., 0, 0].
        out_ref[...] = jnp.broadcast_to(blk.reshape(1, 1, 1, 1), out_ref.shape)

    return kernel


def pallas_loss(Y, D, *, binary_mask: bool = True):
    """Y, D: [B, 2, H, W].  Returns scalar float32 loss.

    binary_mask=True uses the single-log fast path (exact for 0/1 masks,
    whatever their dtype); set binary_mask=False for fractional (soft) masks.
    Y may be bf16 and D int8/bool for ~2.6x less HBM traffic.
    """
    B, C, H, W = Y.shape
    assert C == 2, "loss module uses exactly 2 channels (weights [0.7, 0.3])"
    assert D.shape == Y.shape

    if D.dtype == jnp.bool_:
        D = D.astype(jnp.int8)   # i1 arrays may not lower cleanly on TPU

    rows, lanes = B * C, H * W
    y2 = Y.reshape(rows, lanes)          # free, contiguous reshape
    d2 = D.reshape(rows, lanes)

    # Pad to layout-friendly extents (lane-dense DMA / (8,128)-legal row tile);
    # the padded tail is masked to exact zero inside the kernel.
    lanes_p = -(-lanes // 128) * 128
    rows_p = rows if (rows <= 8 or rows % 8 == 0) else -(-rows // 8) * 8
    if (rows_p, lanes_p) != (rows, lanes):
        pad = ((0, rows_p - rows), (0, lanes_p - lanes))
        y2 = jnp.pad(y2, pad)
        d2 = jnp.pad(d2, pad)

    bpe = y2.dtype.itemsize + d2.dtype.itemsize
    tr, tl = _pick_tiles(rows_p, lanes_p, bpe)
    nb_r, nb_l = rows_p // tr, lanes_p // tl

    n_elems = rows * lanes
    cost = pl.CostEstimate(
        flops=6 * n_elems,
        transcendentals=(n_elems if binary_mask else 2 * n_elems),
        bytes_accessed=int(rows_p * lanes_p * bpe + nb_r * nb_l * 8 * 128 * 4),
    )

    kernel = _make_loss_kernel(
        tr, tl, rows, lanes,
        mask_rows=(rows_p != rows),
        mask_lanes=(lanes_p != lanes),
        binary_mask=binary_mask,
    )

    # Tile pair <= 6 MiB -> 12 MiB double-buffered: no vmem_limit override
    # needed on any generation (and no 60 MiB request that would squeeze v7x).
    # TODO(synk): pipeline_mode=pl.Buffered(3) on the input specs is a minor
    # further win for sub-MiB tiles; left out to keep lowering conservative.
    partials = pl.pallas_call(
        kernel,
        out_shape=jax.ShapeDtypeStruct((nb_r, nb_l, 8, 128), jnp.float32),
        grid_spec=pltpu.PrefetchScalarGridSpec(
            num_scalar_prefetch=0,
            grid=(nb_r, nb_l),
            in_specs=[
                pl.BlockSpec((tr, tl), lambda i, j: (i, j)),
                pl.BlockSpec((tr, tl), lambda i, j: (i, j)),
            ],
            out_specs=pl.BlockSpec((1, 1, 8, 128), lambda i, j: (i, j, 0, 0)),
        ),
        compiler_params=pltpu.CompilerParams(
            dimension_semantics=("parallel", "parallel")),
        cost_estimate=cost,
    )(y2, d2)

    # Tiny final reduction + mean normalisation (weights already folded in).
    # Partials are f32; the (nb_r, nb_l) array is tiny so rounding from this
    # final sum is negligible at practical sizes.
    total = jnp.sum(partials[:, :, 0, 0])
    return -total / jnp.float32(B * H * W)


def reference_loss(Y, D):
    """Pure-JAX reference matching the PyTorch/numpy module exactly."""
    total = 0.0
    for c, w in enumerate(WEIGHTS):
        mask = D[:, c, :, :].astype(jnp.float32)
        out = Y[:, c, :, :].astype(jnp.float32)
        total += -w * jnp.mean(
            mask * jnp.log(out + M_EPS) + (1.0 - mask) * jnp.log(1.0 - out + M_EPS)
        )
    return total


if __name__ == "__main__":
    key = jax.random.PRNGKey(0)
    k1, k2, k3, k4 = jax.random.split(key, 4)

    # Primary small shape implied by the module: [B, 2, H, W].
    B, C, H, W = 2, 2, 16, 16
    Y = jax.nn.sigmoid(jax.random.normal(k1, (B, C, H, W), dtype=jnp.float32))
    D = jax.random.bernoulli(k2, p=0.5, shape=(B, C, H, W)).astype(jnp.float32)

    ref = reference_loss(Y, D)

    # Fast single-log path (exact for 0/1 masks).
    result = pallas_loss(Y, D)
    jax.block_until_ready(result)
    assert jnp.allclose(result, ref, rtol=1e-5, atol=1e-5), (result, ref)

    # Exact two-log fallback for fractional masks.
    result2 = pallas_loss(Y, D, binary_mask=False)
    jax.block_until_ready(result2)
    assert jnp.allclose(result2, ref, rtol=1e-5, atol=1e-5), (result2, ref)

    # Narrow inputs (bf16 Y + int8 D): ~2.6x less HBM traffic on this
    # bandwidth-bound kernel; the kernel upcasts internally.
    result3 = pallas_loss(Y.astype(jnp.bfloat16), D.astype(jnp.int8))
    jax.block_until_ready(result3)
    ref3 = reference_loss(Y.astype(jnp.bfloat16), D)
    assert jnp.allclose(result3, ref3, rtol=1e-4, atol=1e-4), (result3, ref3)

    # Ragged shape: exercises row padding (rows=10 -> 16) and lane padding
    # (lanes=144 -> 256) with in-kernel masking.
    B2, H2, W2 = 5, 12, 12
    Y2 = jax.nn.sigmoid(jax.random.normal(k3, (B2, C, H2, W2), dtype=jnp.float32))
    D2 = jax.random.bernoulli(k4, p=0.5, shape=(B2, C, H2, W2)).astype(jnp.float32)
    result4 = pallas_loss(Y2, D2)
    jax.block_until_ready(result4)
    ref4 = reference_loss(Y2, D2)
    assert jnp.allclose(result4, ref4, rtol=1e-5, atol=1e-5), (result4, ref4)

    print("KERNEL_OK")
</pallas_src>

<mosaic_0001>
module attributes {stable_mosaic.version = 11 : i64} {
  func.func @kernel(%arg0: i32, %arg1: i32, %arg2: memref<4x256xf32, #tpu.memory_space<vmem>>, %arg3: memref<4x256xf32, #tpu.memory_space<vmem>>, %arg4: memref<1x1x8x128xf32, #tpu.memory_space<vmem>>) attributes {dimension_semantics = [#tpu.dimension_semantics<parallel>, #tpu.dimension_semantics<parallel>], iteration_bounds = array<i64: 1, 1>, scalar_prefetch = 0 : i64, scratch_operands = 0 : i64, tpu.core_type = #tpu.core_type<tc>, window_params = [{transform_indices = @transform_0, window_bounds = array<i64: 4, 256>}, {transform_indices = @transform_1, window_bounds = array<i64: 4, 256>}, {transform_indices = @transform_2, window_bounds = array<i64: 1, 1, 8, 128>}]} {
    %c0 = arith.constant 0 : index
    %c0_0 = arith.constant 0 : index
    %0 = vector.load %arg2[%c0, %c0_0] : memref<4x256xf32, #tpu.memory_space<vmem>>, vector<4x256xf32>
    %c0_1 = arith.constant 0 : index
    %c0_2 = arith.constant 0 : index
    %1 = vector.load %arg3[%c0_1, %c0_2] : memref<4x256xf32, #tpu.memory_space<vmem>>, vector<4x256xf32>
    %cst = arith.constant 0.000000e+00 : f32
    %2 = vector.broadcast %cst : f32 to vector<4x256xf32>
    %3 = arith.cmpf one, %1, %2 : vector<4x256xf32>
    %cst_3 = arith.constant 1.000000e+00 : f32
    %4 = vector.broadcast %cst_3 : f32 to vector<4x256xf32>
    %5 = arith.subf %4, %0 : vector<4x256xf32>
    %6 = arith.select %3, %0, %5 : vector<4x256xi1>, vector<4x256xf32>
    %cst_4 = arith.constant 9.99999974E-6 : f32
    %7 = vector.broadcast %cst_4 : f32 to vector<4x256xf32>
    %8 = arith.addf %6, %7 : vector<4x256xf32>
    %9 = math.log %8 : vector<4x256xf32>
    %10 = tpu.iota {dimensions = array<i32: 0>} : vector<4x1xi32>
    %c2_i32 = arith.constant 2 : i32
    %c0_i32 = arith.constant 0 : i32
    %11 = arith.cmpi eq, %c2_i32, %c0_i32 : i32
    %c1_i32 = arith.constant 1 : i32
    %12 = arith.select %11, %c1_i32, %c2_i32 : i32
    %13 = vector.broadcast %12 : i32 to vector<4x1xi32>
    %14 = arith.remsi %10, %13 : vector<4x1xi32>
    %c0_i32_5 = arith.constant 0 : i32
    %15 = vector.broadcast %c0_i32_5 : i32 to vector<4x1xi32>
    %16 = arith.cmpi ne, %14, %15 : vector<4x1xi32>
    %c0_i32_6 = arith.constant 0 : i32
    %17 = vector.broadcast %c0_i32_6 : i32 to vector<4x1xi32>
    %18 = arith.cmpi slt, %14, %17 : vector<4x1xi32>
    %c0_i32_7 = arith.constant 0 : i32
    %19 = arith.cmpi slt, %12, %c0_i32_7 : i32
    %20 = vector.broadcast %19 : i1 to vector<4x1xi1>
    %21 = vector.broadcast %20 : vector<4x1xi1> to vector<4x1xi1>
    %22 = arith.xori %18, %21 : vector<4x1xi1>
    %23 = arith.andi %22, %16 : vector<4x1xi1>
    %24 = vector.broadcast %12 : i32 to vector<4x1xi32>
    %25 = arith.addi %14, %24 : vector<4x1xi32>
    %26 = arith.select %23, %25, %14 : vector<4x1xi1>, vector<4x1xi32>
    %c0_i32_8 = arith.constant 0 : i32
    %27 = vector.broadcast %c0_i32_8 : i32 to vector<4x1xi32>
    %28 = arith.cmpi eq, %26, %27 : vector<4x1xi32>
    %cst_9 = arith.constant 0.699999988 : f32
    %cst_10 = arith.constant 3.000000e-01 : f32
    %29 = vector.broadcast %cst_9 : f32 to vector<4x1xf32>
    %30 = vector.broadcast %cst_10 : f32 to vector<4x1xf32>
    %31 = arith.select %28, %29, %30 : vector<4x1xi1>, vector<4x1xf32>
    %cst_11 = arith.constant dense<0.000000e+00> : vector<4xf32>
    %32 = vector.multi_reduction <add>, %9, %cst_11 [1] : vector<4x256xf32> to vector<4xf32>
    %33 = vector.shape_cast %32 : vector<4xf32> to vector<4x1xf32>
    %34 = arith.mulf %33, %31 : vector<4x1xf32>
    %cst_12 = arith.constant dense<0.000000e+00> : vector<1xf32>
    %35 = vector.multi_reduction <add>, %34, %cst_12 [0] : vector<4x1xf32> to vector<1xf32>
    %36 = vector.shape_cast %35 : vector<1xf32> to vector<1x1xf32>
    %37 = vector.shape_cast %36 : vector<1x1xf32> to vector<1x1x1x1xf32>
    %38 = vector.shape_cast %37 : vector<1x1x1x1xf32> to vector<1x1x1x1xf32>
    %39 = vector.broadcast %38 : vector<1x1x1x1xf32> to vector<1x1x8x128xf32>
    %c0_13 = arith.constant 0 : index
    %c0_14 = arith.constant 0 : index
    %c0_15 = arith.constant 0 : index
    %c0_16 = arith.constant 0 : index
    %40 = vector.load %arg4[%c0_13, %c0_14, %c0_15, %c0_16] : memref<1x1x8x128xf32, #tpu.memory_space<vmem>>, vector<1x1x8x128xf32>
    tpu.vector_store %arg4[%c0_13, %c0_14, %c0_15, %c0_16], %39 {strides = array<i32>} : memref<1x1x8x128xf32, #tpu.memory_space<vmem>>, vector<1x1x8x128xf32>,
    return
  }
  func.func @transform_0(%arg0: i32, %arg1: i32) -> (i32, i32) {
    %c0_i32 = arith.constant 0 : i32
    return %arg0, %arg1 : i32, i32
  }
  func.func @transform_1(%arg0: i32, %arg1: i32) -> (i32, i32) {
    %c0_i32 = arith.constant 0 : i32
    return %arg0, %arg1 : i32, i32
  }
  func.func @transform_2(%arg0: i32, %arg1: i32) -> (i32, i32, i32, i32) {
    %c0_i32 = arith.constant 0 : i32
    %c0_i32_0 = arith.constant 0 : i32
    %c0_i32_1 = arith.constant 0 : i32
    return %arg0, %arg1, %c0_i32, %c0_i32_0 : i32, i32, i32, i32
  }
}

</mosaic_0001>

<llo_original>
// kernel: tpu_custom_call.1
$region0: #{tpu_custom_call.1}
  #allocation0 [shape = 'u32[]', space=smem, size = 0x4, offset = 0x4, fixed_abs, tag = 'smem constant byte address 0x4 - core index']
  #allocation1 [shape = 'u32[72,128]{1,0:T(1,128)}', space=vmem, size = 0x9000, scoped, tag = 'internal scratch']
  %s0 = inlined_call_operand.hbm [shape: f32[4,256], index: 0, kind: input, shape index: {}]
  %s1 = inlined_call_operand.hbm [shape: f32[4,256], index: 1, kind: input, shape index: {}]
  %s2 = inlined_call_operand.hbm [shape: f32[1,1,8,128], index: 2, kind: output, shape index: {}]
  %s3 = sld [smem:[#allocation0]]
  $region26: #{tpu_custom_call.1} parent=0
    _
  %s5 = ssub.s32 1, %s3
  %s6 = scalar_select 0, %s5, %s3
  $region1: #{tpu_custom_call.1} parent=0
    #allocation2 [shape = 'u8[4096]{0}', space=vmem, size = 0x1000, scoped, tag = 'input window, operand 0, single buffered']
    #allocation3 [shape = 's32[1]{0}', space=sflag, size = 0x4, scoped, tag = 'scoped memory for tpu_custom_call.1']
    #allocation4 [shape = 's32[1]{0}', space=sflag, size = 0x4, scoped, tag = 'scoped memory for tpu_custom_call.1']
    #allocation5 [shape = 'u8[4096]{0}', space=vmem, size = 0x1000, scoped, tag = 'input window, operand 1, single buffered']
    #allocation6 [shape = 's32[1]{0}', space=sflag, size = 0x4, scoped, tag = 'scoped memory for tpu_custom_call.1']
    #allocation7 [shape = 'u8[4096]{0}', space=vmem, size = 0x1000, scoped, tag = 'output window, operand 0, single buffered']
    %7 = vsyncpa [#allocation3], 0
    %8 = vsyncpa [#allocation6], 0
    %9 = vsyncpa [#allocation4], 0
    // Predicated region
    $region2: #{tpu_custom_call.1} parent=1 // pred_check
      _
    $region3: #{tpu_custom_call.1} parent=1 // pred_check_branch
      %11 = sbr.rel (0) target = $region5
    $region4: #{tpu_custom_call.1} parent=1 // pred_region
      %13 = vsyncadd [#allocation3], 0
      %s15 = sshll.u32 %s0, 4
      %s16 = int_to_ptr.hbm [resolvable:$true] %s15
      %s17 = sshll.u32 [#allocation2], 4
      %s18 = int_to_ptr.vmem [resolvable:$true] %s17
      %20 = dma.hbm_to_vmem [thread:$0]  %s16, 128, %s18, [#allocation3]
    $region5: #{tpu_custom_call.1} parent=1 // pred_fallthru
      _
    // Predicated region
    $region6: #{tpu_custom_call.1} parent=1 // pred_check
      _
    $region7: #{tpu_custom_call.1} parent=1 // pred_check_branch
      %22 = sbr.rel (0) target = $region9
    $region8: #{tpu_custom_call.1} parent=1 // pred_region
      %24 = vsyncadd [#allocation6], 0
      %s26 = sshll.u32 %s1, 4
      %s27 = int_to_ptr.hbm [resolvable:$true] %s26
      %s28 = sshll.u32 [#allocation5], 4
      %s29 = int_to_ptr.vmem [resolvable:$true] %s28
      %31 = dma.hbm_to_vmem [thread:$0]  %s27, 128, %s29, [#allocation6]
    $region9: #{tpu_custom_call.1} parent=1 // pred_fallthru
      _
    // Predicated region
    $region10: #{tpu_custom_call.1} parent=1 // pred_check
      _
    $region11: #{tpu_custom_call.1} parent=1 // pred_check_branch
      %33 = sbr.rel (0) target = $region13
    $region12: #{tpu_custom_call.1} parent=1 // pred_region
      %35 = dma.done [#allocation3], 128
    $region13: #{tpu_custom_call.1} parent=1 // pred_fallthru
      _
    // Predicated region
    $region14: #{tpu_custom_call.1} parent=1 // pred_check
      _
    $region15: #{tpu_custom_call.1} parent=1 // pred_check_branch
      %37 = sbr.rel (0) target = $region17
    $region16: #{tpu_custom_call.1} parent=1 // pred_region
      %39 = dma.done [#allocation6], 128
    $region17: #{tpu_custom_call.1} parent=1 // pred_fallthru
      _
    %v40 = vld [vmem:[#allocation2] sm:$0xff]
    %v41 = vld [vmem:[#allocation5] sm:$0xff]
    %vm42 = vcmp.ne.f32.partialorder %v41, 0.0
    %v43 = vsub.f32 1.0, %v40
    %v44 = vsel %vm42, %v40, %v43
    %v45 = vadd.f32 %v44, 1e-05
    %v46 = vlog2.pop %v45
    %v47 = vmul.f32 %v46, 0.6931472
    %v48 = vlaneseq
    %v49 = vshrl.u32 %v48, 7
    %vm50 = vcmp.lt.s32.totalorder %v49, 0
    %v51 = vsub.s32 0, %v49
    %v52 = vsel %vm50, %v51, %v49
    %v53 = vshrl.u32 %v52, 1
    %v54 = vand.u32 %v52, 1
    %v55 = vsub.s32 0, %v54
    %v56 = vsel %vm50, %v55, %v54
    %vm57 = vcmp.ne.s32.totalorder %v56, 0
    %vm58 = vcmp.lt.s32.totalorder %v56, 0
    %vm59 = vmand %vm58, %vm57
    %v60 = vadd.s32 %v56, 2
    %v61 = vsel %vm59, %v60, %v56
    %vm62 = vcmp.eq.s32.totalorder %v61, 0
    %v63 = vsel %vm62, 0.7, 0.3
    %65 = vst [vmem:[#allocation1] ss:$2 sm:$0xff] %v47
    %v66 = vld.sshfl [vmem:[#allocation1] sm:$0xff pattern:$0x75316420]
    %v67 = vld.sshfl [vmem:[#allocation1 + $0x8] sm:$0xff pattern:$0x75316420]
    %vm70 = vcmask 1043456
    %v71 = vsel %vm70, %v66, 0.0
    %v72 = vsel %vm70, %v67, 0.0
    %v73 = vadd.f32 %v71, %v72
    %74 = vadd.xlane.f32.xlu0 %v73
    %v75 = vpop.xlane.xlu0 %74
    %v76 = vmul.f32 %v75, %v63
    %v77 = vsel %vm70, %v76, 0.0
    %v78 = vrot.slane %v77, 4
    %v79 = vadd.f32 %v77, %v78
    %v80 = vrot.slane %v79, 2
    %v81 = vadd.f32 %v79, %v80
    %v82 = vrot.slane %v81, 1
    %v83 = vadd.f32 %v81, %v82
    %84 = vst [vmem:[#allocation7] sm:$0xff] %v83
    // Predicated region
    $region18: #{tpu_custom_call.1} parent=1 // pred_check
      _
    $region19: #{tpu_custom_call.1} parent=1 // pred_check_branch
      %86 = sbr.rel (0) target = $region21
    $region20: #{tpu_custom_call.1} parent=1 // pred_region
      %88 = vsyncadd [#allocation4], 0
      %s90 = sshll.u32 [#allocation7], 4
      %s91 = int_to_ptr.vmem [resolvable:$true] %s90
      %s92 = sshll.u32 %s2, 4
      %s93 = int_to_ptr.hbm [resolvable:$true] %s92
      %95 = dma.vmem_to_hbm [thread:$0]  %s91, 128, %s93, [#allocation4]
    $region21: #{tpu_custom_call.1} parent=1 // pred_fallthru
      _
    // Predicated region
    $region22: #{tpu_custom_call.1} parent=1 // pred_check
      _
    $region23: #{tpu_custom_call.1} parent=1 // pred_check_branch
      %97 = sbr.rel (0) target = $region25
    $region24: #{tpu_custom_call.1} parent=1 // pred_region
      %99 = dma.done [#allocation4], 128
    $region25: #{tpu_custom_call.1} parent=1 // pred_fallthru
      _
    %100 = vsyncpa [#allocation3], 1
    %101 = vsyncpa [#allocation6], 1
    %102 = vsyncpa [#allocation4], 1

</llo_original>
